<compile_context>
chip_gen: v6e
topology: v6e:2x2x1
jax: 0.10.0
libtpu: 0.0.40
codegen_flags: <defaults>
</compile_context>

<pallas_src>
import numpy as np
import jax
import jax.numpy as jnp
from jax.experimental import pallas as pl
from jax.experimental.pallas import tpu as pltpu


def _round_up(x, m):
    return ((x + m - 1) // m) * m


def _vmem_limit(need_bytes):
    """Generation-aware VMEM budget: >= actual need, <= 75% of physical VMEM."""
    try:
        cap = getattr(pltpu.get_tpu_info(), "vmem_capacity_bytes", 64 << 20)
    except Exception:
        cap = 64 << 20
    lim = min(max(int(1.25 * need_bytes), 32 << 20), int(0.75 * cap))
    return int(max(lim, need_bytes))


# ---------------------------------------------------------------------------
# Deterministic parameter construction (plain numpy "glue").  Mirrors
# InverseConstantQTransform.__init__ (cqt frequencies, wavelet lengths,
# per-octave conjugate FFT basis, scaling) and folds scale, complex combine and
# irfft into one fused matrix G per octave.
# ---------------------------------------------------------------------------
def build_icqt_params(frame_period, sample_rate, *, f_min=32.7, n_bin=84,
                      n_bin_per_octave=12, filter_scale=1.0):
    K = n_bin
    B = n_bin_per_octave
    n_octave = int(np.ceil(K / B))
    freqs = f_min * 2.0 ** (np.arange(K) / B)            # cqt_frequencies, tuning=0
    Q = filter_scale / (2.0 ** (1.0 / B) - 1.0)
    lengths = Q * sample_rate / freqs                    # wavelet_lengths (gamma=0)
    cqt_scale = np.sqrt(lengths)                         # scale=True

    fp = [frame_period]
    sr = [sample_rate]
    for i in range(n_octave - 1):
        if fp[i] % 2 == 0:
            fp.append(fp[i] // 2)
            sr.append(sr[i] // 2)
        else:
            fp.append(fp[i])
            sr.append(sr[i])
    fp.reverse()
    sr.reverse()

    octaves = []
    for i in range(n_octave):
        n_filter = min(B, K - B * i)
        sl = slice(B * i, B * i + n_filter)
        f_sl = freqs[sl]
        len_i = Q * sr[i] / f_sl                          # lengths at octave's sr
        fft_length = int(2 ** np.ceil(np.log2(len_i.max())))
        n_bins = fft_length // 2 + 1

        # Time-domain complex wavelets -> conjugate rFFT basis (no sparsification).
        basis = np.zeros((n_filter, fft_length), dtype=np.complex128)
        for k in range(n_filter):
            ilen = max(int(np.floor(len_i[k])), 1)
            t = np.arange(ilen) - ilen // 2
            sig = np.exp(2j * np.pi * f_sl[k] * t / sr[i])
            win = np.hanning(ilen) if ilen > 1 else np.ones(1)
            sig = sig * win
            sig = sig / np.abs(sig).sum()                 # norm=1
            start = (fft_length - ilen) // 2
            basis[k, start:start + ilen] = sig
        basis *= len_i[:, None] / fft_length
        fft_basis = np.fft.fft(basis, axis=1)[:, :n_bins].conj()
        freq_power = 1.0 / np.sum(np.abs(fft_basis) ** 2, axis=1)
        freq_power *= fft_length / lengths[sl]
        fft_basis = fft_basis * freq_power[:, None]
        wr = np.real(fft_basis)
        wi = np.imag(fft_basis)

        # irfft expressed as two real matmuls: frame = Xr @ Fr + Xi @ Fi.
        n = np.arange(fft_length)
        f = np.arange(n_bins)
        w = np.full(n_bins, 2.0)
        w[0] = 1.0
        if fft_length % 2 == 0:
            w[-1] = 1.0
        ang = 2.0 * np.pi * np.outer(f, n) / fft_length
        Fr = (w[:, None] * np.cos(ang)) / fft_length
        Fi = (-w[:, None] * np.sin(ang)) / fft_length

        # Fused (2*Kf, L) matrix: frames = [cr, ci] @ G  (cqt scale folded in).
        Gr = wr @ Fr + wi @ Fi
        Gi = wr @ Fi - wi @ Fr
        s = cqt_scale[sl][:, None]
        G = np.concatenate([s * Gr, s * Gi], axis=0).astype(np.float32)

        octaves.append(dict(
            sl=(B * i, B * i + n_filter),
            G=G,                                          # (2*Kf, fft_length)
            fft_length=fft_length,
            hop=fp[i],
            up=sample_rate // sr[i],
        ))
    return octaves


# ---------------------------------------------------------------------------
# Banded kaiser_best sinc upsampler (torchaudio Resample, orig_freq=1 -> up).
# Stored compactly per output block: R_band[j] holds the contributing rows of R
# for output columns [j*tn, (j+1)*tn); kmap[j, k] is the signal K-block feeding
# the k-th step of the banded contraction.
# ---------------------------------------------------------------------------
def build_banded_upsample(length_in, up, tk, tn, *, lowpass_filter_width=64,
                          rolloff=0.9475937167399596, beta=14.769656459379492):
    base_freq = rolloff                                   # min(1, up) * rolloff
    width = int(np.ceil(lowpass_filter_width / base_freq))
    idx = np.arange(-width, width + 1, dtype=np.float64)
    kernels = np.zeros((up, 2 * width + 1))
    for p in range(up):
        t = np.clip((-p / up + idx) * base_freq,
                    -lowpass_filter_width, lowpass_filter_width)
        window = np.i0(beta * np.sqrt(1.0 - (t / lowpass_filter_width) ** 2)) / np.i0(beta)
        tpi = t * np.pi
        k = np.where(tpi == 0.0, 1.0, np.sin(tpi) / np.where(tpi == 0.0, 1.0, tpi))
        kernels[p] = k * window * base_freq

    n_out = up * length_in
    n_jblocks = -(-n_out // tn)
    n_kblocks = -(-length_in // tk)

    kb_lo = np.zeros(n_jblocks, dtype=np.int64)
    kb_hi = np.zeros(n_jblocks, dtype=np.int64)
    for j in range(n_jblocks):
        c0 = j * tn
        c1 = min((j + 1) * tn, n_out) - 1
        if c0 >= n_out:
            continue
        lo = c0 // up - width
        hi = c1 // up + width
        kb_lo[j] = max(0, min(lo, length_in - 1)) // tk
        kb_hi[j] = max(0, min(hi, length_in - 1)) // tk
    n_kband = min(int((kb_hi - kb_lo).max()) + 1, n_kblocks)
    kb_lo = np.minimum(kb_lo, max(n_kblocks - n_kband, 0))
    kmap = kb_lo[:, None] + np.arange(n_kband)[None, :]
    kmap = np.minimum(kmap, n_kblocks - 1).astype(np.int32)

    R_band = np.zeros((n_jblocks, n_kband * tk, tn), dtype=np.float64)
    for n in range(length_in):
        for p in range(up):
            c = n * up + p
            j = c // tn
            cl = c - j * tn
            m_lo = max(0, n - width)
            m_hi = min(length_in - 1, n + width)
            if m_lo > m_hi:
                continue
            rows = np.arange(m_lo, m_hi + 1)
            R_band[j, rows - kb_lo[j] * tk, cl] = kernels[p, rows - n + width]
    return R_band.astype(np.float32), kmap


# ---------------------------------------------------------------------------
# Pallas kernels
# ---------------------------------------------------------------------------
def _matmul_resident_kernel(x_ref, w_ref, o_ref):
    # Whole contraction dim in one block: no accumulator, single store per tile.
    o_ref[...] = jnp.dot(x_ref[...], w_ref[...],
                         preferred_element_type=jnp.float32).astype(o_ref.dtype)


def pallas_matmul_resident(x, w, *, tm_max=256, tn_max=2048):
    """y = x @ w where K = x.shape[1] is small and kept as one un-padded block
    (block dim == full array dim is legal).  Grid over (M, N) only."""
    M, K = x.shape
    K2, N = w.shape
    assert K == K2
    tm = min(tm_max, _round_up(M, 8))
    Mp = _round_up(M, tm)
    mg = Mp // tm
    tn = min(tn_max, N)                    # N is a power-of-two multiple of 128
    while mg * (N // tn) < 2 and tn >= 256:
        tn //= 2                           # give the v7x megacore >= 2 blocks
    ng = N // tn

    xp = jnp.pad(x, ((0, Mp - M), (0, 0))) if Mp != M else x
    need = (2 * (tm * K * xp.dtype.itemsize + K * tn * w.dtype.itemsize)
            + 2 * tm * tn * 4)
    out = pl.pallas_call(
        _matmul_resident_kernel,
        out_shape=jax.ShapeDtypeStruct((Mp, N), jnp.float32),
        grid=(mg, ng),
        in_specs=[pl.BlockSpec((tm, K), lambda i, j: (i, 0)),
                  pl.BlockSpec((K, tn), lambda i, j: (0, j))],
        out_specs=pl.BlockSpec((tm, tn), lambda i, j: (i, j)),
        compiler_params=pltpu.CompilerParams(
            dimension_semantics=("parallel", "parallel"),
            vmem_limit_bytes=_vmem_limit(need)),
    )(xp, w)
    return out[:M]


def _banded_matmul_kernel(kmap_ref, x_ref, w_ref, o_ref, acc_ref):
    @pl.when(pl.program_id(2) == 0)
    def _():
        acc_ref[...] = jnp.zeros_like(acc_ref)

    acc_ref[...] += jnp.dot(x_ref[...], w_ref[...],
                            preferred_element_type=jnp.float32)

    @pl.when(pl.program_id(2) == pl.num_programs(2) - 1)
    def _():
        o_ref[...] = acc_ref[...].astype(o_ref.dtype)


def pallas_banded_matmul(x, w_band, kmap, *, tk, tn, n_out, tm_max=256):
    """y = x @ R for a banded R, streaming only the contributing K blocks.
    kmap (scalar-prefetched to SMEM) redirects the K index_map of x per output
    block; the K grid axis stays last and 'arbitrary' (accumulator pattern)."""
    M, K = x.shape
    n_jblocks, kband_rows, tn_w = w_band.shape
    assert tn_w == tn and kband_rows % tk == 0
    n_kband = kband_rows // tk
    n_kblocks = pl.cdiv(K, tk)
    Kp = n_kblocks * tk
    tm = min(tm_max, _round_up(M, 8))
    Mp = _round_up(M, tm)
    xp = jnp.pad(x, ((0, Mp - M), (0, Kp - K))) if (Mp, Kp) != (M, K) else x

    need = (2 * (tm * tk * xp.dtype.itemsize + tk * tn * w_band.dtype.itemsize)
            + 2 * tm * tn * 4 + tm * tn * 4)
    out = pl.pallas_call(
        _banded_matmul_kernel,
        out_shape=jax.ShapeDtypeStruct((Mp, n_jblocks * tn), jnp.float32),
        grid_spec=pltpu.PrefetchScalarGridSpec(
            num_scalar_prefetch=1,
            grid=(Mp // tm, n_jblocks, n_kband),
            in_specs=[
                pl.BlockSpec((tm, tk), lambda i, j, k, km: (i, km[j, k])),
                pl.BlockSpec((None, tk, tn), lambda i, j, k, km: (j, k, 0)),
            ],
            out_specs=pl.BlockSpec((tm, tn), lambda i, j, k, km: (i, j)),
            scratch_shapes=[pltpu.VMEM((tm, tn), jnp.float32)]),
        compiler_params=pltpu.CompilerParams(
            dimension_semantics=("parallel", "parallel", "arbitrary"),
            vmem_limit_bytes=_vmem_limit(need)),
    )(kmap, xp, w_band)
    return out[:M, :n_out]


# ---------------------------------------------------------------------------
# JAX glue
# ---------------------------------------------------------------------------
def overlap_add(frames, hop):
    """Rectangular-window, norm='none' overlap-add: (B,T,L) -> (B,(T-1)*hop+L).
    Done with ONE skewed pad+reshape+reduce (no r-way .at adds)."""
    B, T, L = frames.shape
    r = -(-L // hop)                                   # ceil(L / hop)
    Lp = r * hop
    if Lp != L:
        frames = jnp.pad(frames, ((0, 0), (0, 0), (0, Lp - L)))
    fr = frames.reshape(B, T, r, hop)
    if T <= 3 * r:
        # skew trick: pad r-axis to T+r, flatten, drop tail, reshape, sum over T
        frp = jnp.pad(fr, ((0, 0), (0, 0), (0, T), (0, 0)))     # (B,T,T+r,hop)
        flat = frp.reshape(B, T * (T + r), hop)[:, :T * (T + r - 1), :]
        out = flat.reshape(B, T, T + r - 1, hop).sum(axis=1)
        out = out.reshape(B, (T + r - 1) * hop)
    else:
        # fallback for very long T (skew intermediate would be O(T^2))
        out = jnp.zeros((B, T + r - 1, hop), jnp.float32)
        for j in range(r):
            out = out.at[:, j:j + T, :].add(fr[:, :, j, :])
        out = out.reshape(B, (T + r - 1) * hop)
    return out[:, :(T - 1) * hop + L]


def _pick_band_tn(n_out):
    np0 = _round_up(n_out, 128)
    if np0 >= 2048:
        return 512
    if np0 >= 256:
        half = np0 // 2
        return half if half % 128 == 0 else 128
    return 128


def make_icqt_forward(octaves, T_frames, out_length):
    """Precompute device-resident per-octave constants (fused basis G padded to
    a lane-dense width, banded upsampler R_band + kmap) and return a jitted
    forward pass."""
    consts = []
    for oc in octaves:
        L, hop, up = oc["fft_length"], oc["hop"], oc["up"]
        Np = max(_round_up(L, 128), 128)               # lane-dense, power of two
        Gp = np.zeros((oc["G"].shape[0], Np), np.float32)
        Gp[:, :L] = oc["G"]
        entry = dict(sl=oc["sl"], G=jnp.asarray(Gp, jnp.float32),
                     L=L, hop=hop, up=up)
        if up > 1:
            sig_len = (T_frames - 1) * hop + L - L // 2   # length after center trim
            n_out = up * sig_len
            tk = min(512, _round_up(sig_len, 128))
            tn = _pick_band_tn(n_out)
            R_band, kmap = build_banded_upsample(sig_len, up, tk, tn)
            entry.update(n_out=n_out, tk=tk, tn=tn,
                         R_band=jnp.asarray(R_band, jnp.bfloat16),
                         kmap=jnp.asarray(kmap, jnp.int32))
        consts.append(entry)

    def forward(c):
        batch_shape = c.shape[:-2]
        T, K = c.shape[-2:]
        c2 = c.reshape((-1, T, K))
        Bt = c2.shape[0]
        cr = jnp.real(c2).astype(jnp.float32)
        ci = jnp.imag(c2).astype(jnp.float32)
        y = None
        for m in consts:
            lo, hi = m["sl"]
            # Flatten batch*time into the matmul M axis; concat re/im so the
            # whole octave is one matmul with contraction 2*Kf (<= 24, un-padded).
            x = jnp.concatenate([cr[..., lo:hi], ci[..., lo:hi]], axis=-1)
            x = x.reshape(Bt * T, 2 * (hi - lo))
            frames = pallas_matmul_resident(x, m["G"])[:, :m["L"]]
            frames = frames.reshape(Bt, T, m["L"])
            sig = overlap_add(frames, m["hop"])
            sig = sig[:, m["L"] // 2:]                 # center=True trim
            if m["up"] > 1:                            # banded kaiser_best upsample
                sig = pallas_banded_matmul(sig.astype(m["R_band"].dtype),
                                           m["R_band"], m["kmap"],
                                           tk=m["tk"], tn=m["tn"],
                                           n_out=m["n_out"])
            if y is None:
                y = sig[:, :out_length]
            else:
                end = min(sig.shape[-1], y.shape[-1], out_length)
                y = y.at[:, :end].add(sig[:, :end])
        return y.reshape(batch_shape + (y.shape[-1],))

    return jax.jit(forward)


if __name__ == "__main__":
    frame_period = 16
    sample_rate = 8000
    n_bin = 8
    n_bin_per_octave = 4
    f_min = 500.0
    T_frames = 8
    out_length = frame_period * T_frames              # 128 samples

    octaves = build_icqt_params(frame_period, sample_rate, f_min=f_min,
                                n_bin=n_bin, n_bin_per_octave=n_bin_per_octave)
    icqt = make_icqt_forward(octaves, T_frames, out_length)

    key = jax.random.PRNGKey(0)
    kr, ki = jax.random.split(key)
    batch = (2,)
    c = (jax.random.normal(kr, batch + (T_frames, n_bin), dtype=jnp.float32)
         + 1j * jax.random.normal(ki, batch + (T_frames, n_bin), dtype=jnp.float32)
         ).astype(jnp.complex64)

    y = icqt(c)
    y = jax.block_until_ready(y)

    assert y.shape == batch + (out_length,), y.shape
    assert y.dtype == jnp.float32, y.dtype
    assert bool(jnp.all(jnp.isfinite(y)))
    print("KERNEL_OK")
</pallas_src>

<mosaic_0001>
module attributes {stable_mosaic.version = 11 : i64} {
  func.func @_matmul_resident_kernel(%arg0: i32, %arg1: i32, %arg2: memref<16x8xf32, #tpu.memory_space<vmem>>, %arg3: memref<8x128xf32, #tpu.memory_space<vmem>>, %arg4: memref<16x128xf32, #tpu.memory_space<vmem>>) attributes {dimension_semantics = [#tpu.dimension_semantics<parallel>, #tpu.dimension_semantics<parallel>], iteration_bounds = array<i64: 1, 1>, scalar_prefetch = 0 : i64, scratch_operands = 0 : i64, tpu.core_type = #tpu.core_type<tc>, window_params = [{transform_indices = @transform_0, window_bounds = array<i64: 16, 8>}, {transform_indices = @transform_1, window_bounds = array<i64: 8, 128>}, {transform_indices = @transform_2, window_bounds = array<i64: 16, 128>}]} {
    %c0 = arith.constant 0 : index
    %c0_0 = arith.constant 0 : index
    %0 = vector.load %arg2[%c0, %c0_0] : memref<16x8xf32, #tpu.memory_space<vmem>>, vector<16x8xf32>
    %c0_1 = arith.constant 0 : index
    %c0_2 = arith.constant 0 : index
    %1 = vector.load %arg3[%c0_1, %c0_2] : memref<8x128xf32, #tpu.memory_space<vmem>>, vector<8x128xf32>
    %cst = arith.constant dense<0.000000e+00> : vector<16x128xf32>
    %2 = tpu.matmul %0, %1, %cst {dimension_numbers = #tpu.dot_dimension_numbers<[1], [0], [0], [1], [0, 0, 1, 1], [], []>} : vector<16x8xf32>, vector<8x128xf32>, vector<16x128xf32> -> vector<16x128xf32>
    %c0_3 = arith.constant 0 : index
    %c0_4 = arith.constant 0 : index
    %3 = vector.load %arg4[%c0_3, %c0_4] : memref<16x128xf32, #tpu.memory_space<vmem>>, vector<16x128xf32>
    tpu.vector_store %arg4[%c0_3, %c0_4], %2 {strides = array<i32>} : memref<16x128xf32, #tpu.memory_space<vmem>>, vector<16x128xf32>,
    return
  }
  func.func @transform_0(%arg0: i32, %arg1: i32) -> (i32, i32) {
    %c0_i32 = arith.constant 0 : i32
    %c0_i32_0 = arith.constant 0 : i32
    return %arg0, %c0_i32 : i32, i32
  }
  func.func @transform_1(%arg0: i32, %arg1: i32) -> (i32, i32) {
    %c0_i32 = arith.constant 0 : i32
    %c0_i32_0 = arith.constant 0 : i32
    return %c0_i32, %arg1 : i32, i32
  }
  func.func @transform_2(%arg0: i32, %arg1: i32) -> (i32, i32) {
    %c0_i32 = arith.constant 0 : i32
    return %arg0, %arg1 : i32, i32
  }
}

module attributes {stable_mosaic.version = 11 : i64} {
  func.func @_banded_matmul_kernel(%arg0: i32, %arg1: i32, %arg2: i32, %arg3: memref<2x1xi32, #tpu.memory_space<smem>>, %arg4: memref<8x128xbf16, #tpu.memory_space<vmem>>, %arg5: memref<1x128x128xbf16, #tpu.memory_space<vmem>>, %arg6: memref<8x128xf32, #tpu.memory_space<vmem>>, %arg7: memref<8x128xf32, #tpu.memory_space<vmem>>) attributes {dimension_semantics = [#tpu.dimension_semantics<parallel>, #tpu.dimension_semantics<parallel>, #tpu.dimension_semantics<arbitrary>], iteration_bounds = array<i64: 1, 2, 1>, scalar_prefetch = 1 : i64, scratch_operands = 1 : i64, tpu.core_type = #tpu.core_type<tc>, window_params = [{transform_indices = @transform_0, window_bounds = array<i64: 8, 128>}, {transform_indices = @transform_1, window_bounds = array<i64: 1, 128, 128>}, {transform_indices = @transform_2, window_bounds = array<i64: 8, 128>}]} {
    %c0_i32 = arith.constant 0 : i32
    %0 = arith.cmpi eq, %arg2, %c0_i32 : i32
    %1 = arith.extui %0 : i1 to i32
    %c0_i32_0 = arith.constant 0 : i32
    %2 = arith.cmpi ne, %1, %c0_i32_0 : i32
    scf.if %2 {
      %cst_11 = arith.constant 0.000000e+00 : f32
      %13 = vector.broadcast %cst_11 : f32 to vector<8x128xf32>
      %c0_12 = arith.constant 0 : index
      %c0_13 = arith.constant 0 : index
      %14 = vector.load %arg7[%c0_12, %c0_13] : memref<8x128xf32, #tpu.memory_space<vmem>>, vector<8x128xf32>
      tpu.vector_store %arg7[%c0_12, %c0_13], %13 {strides = array<i32>} : memref<8x128xf32, #tpu.memory_space<vmem>>, vector<8x128xf32>,
    } else {
    }
    %c0 = arith.constant 0 : index
    %c0_1 = arith.constant 0 : index
    %3 = vector.load %arg7[%c0, %c0_1] : memref<8x128xf32, #tpu.memory_space<vmem>>, vector<8x128xf32>
    %c0_2 = arith.constant 0 : index
    %c0_3 = arith.constant 0 : index
    %4 = vector.load %arg4[%c0_2, %c0_3] : memref<8x128xbf16, #tpu.memory_space<vmem>>, vector<8x128xbf16>
    %c0_4 = arith.constant 0 : index
    %c0_5 = arith.constant 0 : index
    %c0_6 = arith.constant 0 : index
    %5 = vector.load %arg5[%c0_4, %c0_5, %c0_6] : memref<1x128x128xbf16, #tpu.memory_space<vmem>>, vector<1x128x128xbf16>
    %6 = vector.shape_cast %5 : vector<1x128x128xbf16> to vector<128x128xbf16>
    %cst = arith.constant dense<0.000000e+00> : vector<8x128xf32>
    %7 = tpu.matmul %4, %6, %cst {dimension_numbers = #tpu.dot_dimension_numbers<[1], [0], [0], [1], [0, 0, 1, 1], [], []>} : vector<8x128xbf16>, vector<128x128xbf16>, vector<8x128xf32> -> vector<8x128xf32>
    %8 = arith.addf %3, %7 : vector<8x128xf32>
    %c0_7 = arith.constant 0 : index
    %c0_8 = arith.constant 0 : index
    %9 = vector.load %arg7[%c0_7, %c0_8] : memref<8x128xf32, #tpu.memory_space<vmem>>, vector<8x128xf32>
    tpu.vector_store %arg7[%c0_7, %c0_8], %8 {strides = array<i32>} : memref<8x128xf32, #tpu.memory_space<vmem>>, vector<8x128xf32>,
    %c0_i32_9 = arith.constant 0 : i32
    %10 = arith.cmpi eq, %arg2, %c0_i32_9 : i32
    %11 = arith.extui %10 : i1 to i32
    %c0_i32_10 = arith.constant 0 : i32
    %12 = arith.cmpi ne, %11, %c0_i32_10 : i32
    scf.if %12 {
      %c0_11 = arith.constant 0 : index
      %c0_12 = arith.constant 0 : index
      %13 = vector.load %arg7[%c0_11, %c0_12] : memref<8x128xf32, #tpu.memory_space<vmem>>, vector<8x128xf32>
      %c0_13 = arith.constant 0 : index
      %c0_14 = arith.constant 0 : index
      %14 = vector.load %arg6[%c0_13, %c0_14] : memref<8x128xf32, #tpu.memory_space<vmem>>, vector<8x128xf32>
      tpu.vector_store %arg6[%c0_13, %c0_14], %13 {strides = array<i32>} : memref<8x128xf32, #tpu.memory_space<vmem>>, vector<8x128xf32>,
    } else {
    }
    return
  }
  func.func @transform_0(%arg0: i32, %arg1: i32, %arg2: i32, %arg3: memref<2x1xi32, #tpu.memory_space<smem>>) -> (i32, i32) {
    %0 = arith.index_cast %arg1 : i32 to index
    %1 = arith.index_cast %arg2 : i32 to index
    %2 = memref.load %arg3[%0, %1] : memref<2x1xi32, #tpu.memory_space<smem>>
    %c0_i32 = arith.constant 0 : i32
    return %arg0, %2 : i32, i32
  }
  func.func @transform_1(%arg0: i32, %arg1: i32, %arg2: i32, %arg3: memref<2x1xi32, #tpu.memory_space<smem>>) -> (i32, i32, i32) {
    %c0_i32 = arith.constant 0 : i32
    %c0_i32_0 = arith.constant 0 : i32
    return %arg1, %arg2, %c0_i32 : i32, i32, i32
  }
  func.func @transform_2(%arg0: i32, %arg1: i32, %arg2: i32, %arg3: memref<2x1xi32, #tpu.memory_space<smem>>) -> (i32, i32) {
    %c0_i32 = arith.constant 0 : i32
    return %arg0, %arg1 : i32, i32
  }
}

</mosaic_0001>

<llo_original>
// kernel: custom-call
$region0: #{custom-call}
  %s0 = inlined_call_operand.hbm [shape: c64[2,8,8], index: 0, kind: input, shape index: {}]
  %s1 = inlined_call_operand.vmem [shape: f32[2,8,8], index: 1, kind: output, shape index: {}]
  $region1: #{custom-call} parent=0
    #allocation0 [shape = 's32[1]{0}', space=sflag, size = 0x4, scoped, tag = 'scoped memory for custom-call']
    %2 = vsyncpa [#allocation0], 0
    %s3 = sshll.u32 %s1, 4
    %s4 = int_to_ptr.vmem [resolvable:$true] %s3
    %6 = dma.hbm_to_vmem [thread:$0]  %s0, 256, %s4, [#allocation0]
    %7 = dma.done [#allocation0], 256
    %8 = vsyncpa [#allocation0], 1

// kernel: custom-call.1
$region0: #{custom-call.1}
  %s0 = inlined_call_operand.hbm [shape: c64[2,8,8], index: 0, kind: input, shape index: {}]
  %s1 = inlined_call_operand.vmem [shape: f32[2,8,8], index: 1, kind: output, shape index: {}]
  %s2 = scalar_lea.hbm %s0, 256
  $region1: #{custom-call.1} parent=0
    #allocation0 [shape = 's32[1]{0}', space=sflag, size = 0x4, scoped, tag = 'scoped memory for custom-call.1']
    %3 = vsyncpa [#allocation0], 0
    %s4 = sshll.u32 %s1, 4
    %s5 = int_to_ptr.vmem [resolvable:$true] %s4
    %7 = dma.hbm_to_vmem [thread:$0]  %s2, 256, %s5, [#allocation0]
    %8 = dma.done [#allocation0], 256
    %9 = vsyncpa [#allocation0], 1

// kernel: forward.4
$region0: #{forward.4}
  #allocation0 [shape = 'u32[]', space=smem, size = 0x4, offset = 0x4, fixed_abs, tag = 'smem constant byte address 0x4 - core index']
  #allocation1 [shape = 'u32[144,128]{1,0:T(1,128)}', space=vmem, size = 0x12000, scoped, tag = 'internal scratch']
  #allocation2 [shape = 'f32[8,128]{1,0:T(8,128)}', space=vmem, size = 0x1000, scoped, tag = 'scratch operand']
  #allocation3 [shape = 's32[1]{0}', space=sflag, size = 0x4, scoped, tag = 'scoped memory for forward.4']
  #allocation4 [shape = 'u8[1024]{0}', space=smem, size = 0x400, scoped, tag = 'prefetched SMEM operand 0']
  %s0 = inlined_call_operand.vmem [shape: s32[2,1], index: 0, kind: input, shape index: {}]
  %s1 = inlined_call_operand.vmem [shape: bf16[8,128], index: 1, kind: input, shape index: {}]
  %s2 = inlined_call_operand.vmem [shape: bf16[2,128,128], index: 2, kind: input, shape index: {}]
  %s3 = inlined_call_operand.vmem [shape: f32[8,256], index: 3, kind: output, shape index: {}]
  %s4 = sld [smem:[#allocation0]]
  $region49: #{forward.4} parent=0
    _
  %s6 = ssub.s32 1, %s4
  %s7 = scalar_select 0, %s6, %s4
  %s8 = sshll.u32 %s0, 4
  %s9 = int_to_ptr.vmem [resolvable:$true] %s8
  %11 = dma.vmem_to_smem %s9, 32, [#allocation4], [#allocation3]
  %12 = dma.done [#allocation3], 32
  %13 = sfence
  loop: start=0, step=1, limit=4
  $region2: #{forward.4} parent=0 // loop_pre_header
    _
  $region3: #{forward.4} parent=0 // loop_header
    %s15 = sphi 0, %s19
    %p16 = scmp.ge.s32.totalorder %s15, 4
    %s22 = sphi 0, %s41
    %s23 = sphi 0, %s37
    %s24 = sphi 0, %s33
    %s25 = sphi 0, %s22
    %s26 = sphi 0, %s23
    %s27 = sphi 0, %s24
    %s28 = sphi 0, %s25
    %s29 = sphi 0, %s26
    %s30 = sphi 0, %s27
    %s62 = sphi 0, %s64
    %s65 = sphi 0, %s62
    %s66 = sphi 0, %s65
    %s82 = sphi 0, %s66
    %s90 = sphi 0, %s92
    %s93 = sphi 0, %s90
    %s94 = sphi 0, %s93
    %s110 = sphi 0, %s94
    %s118 = sphi 0, %s120
    %s121 = sphi 0, %s118
    %s122 = sphi 0, %s121
    %s138 = sphi 0, %s122
  $region4: #{forward.4} parent=0 // loop_header_branch
    %18 = sbr.rel (%p16) target = $region8
  $region5: #{forward.4} parent=0 // loop_body
    %s20 = ssub.s32 %s15, 1
    %s21 = ssub.s32 %s15, 2
    %s31 = sadd.s32 1, %s24
    %p32 = scmp.ge.s32.totalorder %s31, 1
    %s33 = scalar_select %p32, 0, %s31
    %s34 = sadd.s32 1, %s23
    %s35 = scalar_select %p32, %s34, %s23
    %p36 = scmp.ge.s32.totalorder %s35, 2
    %s37 = scalar_select %p36, 0, %s35
    %s38 = sadd.s32 1, %s22
    %s39 = scalar_select %p36, %s38, %s22
    %p40 = scmp.ge.s32.totalorder %s39, 1
    %s41 = scalar_select %p40, 0, %s39
    %s42 = sshra.s32 %s24, 7
    %s43 = sand.u32 %s24, 127
    %s44 = sadd.s32 %s42, %s23
    %s45 = smul.u32 %s44, 128
    %s46 = sshra.s32 %s24, 7
    %s47 = sand.u32 %s24, 127
    %s48 = sadd.s32 %s45, %s47
    %s49 = sld [smem:[#allocation4 + %s48]]
    %s50 = sshra.s32 %s33, 7
    %s51 = sand.u32 %s33, 127
    %s52 = sadd.s32 %s50, %s37
    %s53 = smul.u32 %s52, 128
    %s54 = sshra.s32 %s33, 7
    %s55 = sand.u32 %s33, 127
    %s56 = sadd.s32 %s53, %s55
    %s57 = sld [smem:[#allocation4 + %s56]]
    %s58 = ssub.s32 %s22, %s41
    %s59 = ssub.s32 %s49, %s57
    %s60 = sor.u32 %s58, %s59
    %p61 = scmp.eq.s32.totalorder %s60, 0
    %s63 = sadd.s32 %s62, 1
    %s64 = scalar_select %p61, %s62, %s63
    %p67 = pneg %p61
    %p68 = scmp.eq.s32.totalorder %s15, 1
    %p69 = por %p67, %p68
    %p70 = scmp.ne.s32.totalorder %s62, %s65
    %p71 = scmp.eq.s32.totalorder %s15, 0
    %p72 = por %p70, %p71
    %p73 = scmp.ne.s32.totalorder %s62, %s65
    %p74 = scmp.eq.s32.totalorder %s20, 1
    %p75 = por %p73, %p74
    %p76 = scmp.ne.s32.totalorder %s65, %s66
    %p77 = scmp.eq.s32.totalorder %s20, 0
    %p78 = por %p76, %p77
    %p79 = scmp.ne.s32.totalorder %s65, %s66
    %p80 = scmp.eq.s32.totalorder %s21, 1
    %p81 = por %p79, %p80
    %p83 = scmp.ne.s32.totalorder %s66, %s82
    %p84 = scmp.eq.s32.totalorder %s21, 0
    %p85 = por %p83, %p84
    %s86 = ssub.s32 %s23, %s37
    %s87 = ssub.s32 %s24, %s33
    %s88 = sor.u32 %s86, %s87
    %p89 = scmp.eq.s32.totalorder %s88, 0
    %s91 = sadd.s32 %s90, 1
    %s92 = scalar_select %p89, %s90, %s91
    %p95 = pneg %p89
    %p96 = scmp.eq.s32.totalorder %s15, 1
    %p97 = por %p95, %p96
    %p98 = scmp.ne.s32.totalorder %s90, %s93
    %p99 = scmp.eq.s32.totalorder %s15, 0
    %p100 = por %p98, %p99
    %p101 = scmp.ne.s32.totalorder %s90, %s93
    %p102 = scmp.eq.s32.totalorder %s20, 1
    %p103 = por %p101, %p102
    %p104 = scmp.ne.s32.totalorder %s93, %s94
    %p105 = scmp.eq.s32.totalorder %s20, 0
    %p106 = por %p104, %p105
    %p107 = scmp.ne.s32.totalorder %s93, %s94
    %p108 = scmp.eq.s32.totalorder %s21, 1
    %p109 = por %p107, %p108
    %p111 = scmp.ne.s32.totalorder %s94, %s110
    %p112 = scmp.eq.s32.totalorder %s21, 0
    %p113 = por %p111, %p112
    %s114 = ssub.s32 %s22, %s41
    %s115 = ssub.s32 %s23, %s37
    %s116 = sor.u32 %s114, %s115
    %p117 = scmp.eq.s32.totalorder %s116, 0
    %s119 = sadd.s32 %s118, 1
    %s120 = scalar_select %p117, %s118, %s119
    %p123 = pneg %p117
    %p124 = scmp.eq.s32.totalorder %s15, 1
    %p125 = por %p123, %p124
    %p126 = scmp.ne.s32.totalorder %s118, %s121
    %p127 = scmp.eq.s32.totalorder %s15, 0
    %p128 = por %p126, %p127
    %p129 = scmp.ne.s32.totalorder %s118, %s121
    %p130 = scmp.eq.s32.totalorder %s20, 1
    %p131 = por %p129, %p130
    %p132 = scmp.ne.s32.totalorder %s121, %s122
    %p133 = scmp.eq.s32.totalorder %s20, 0
    %p134 = por %p132, %p133
    %p135 = scmp.ne.s32.totalorder %s121, %s122
    %p136 = scmp.eq.s32.totalorder %s21, 1
    %p137 = por %p135, %p136
    %p139 = scmp.ne.s32.totalorder %s122, %s138
    %p140 = scmp.eq.s32.totalorder %s21, 0
    %p141 = por %p139, %p140
    %p142 = scmp.le.s32.totalorder 1, %s15
    %p143 = scmp.lt.s32.totalorder %s15, 3
    %p144 = pnand %p142, %p143
    %p145 = pneg %p144
    // Predicated region
    $region9: #{forward.4} parent=5 // pred_check
      _
    $region10: #{forward.4} parent=5 // pred_check_branch
      %147 = sbr.rel (%p144) target = $region12
    $region11: #{forward.4} parent=5 // pred_region
      %s148 = ssub.s32 %s15, 1
    $region12: #{forward.4} parent=5 // pred_fallthru
      _
    %p149 = scmp.lt.s32.totalorder %s15, 2
    // Predicated region
    $region13: #{forward.4} parent=5 // pred_check
      %p150 = pneg %p149
    $region14: #{forward.4} parent=5 // pred_check_branch
      %152 = sbr.rel (%p150) target = $region16
    $region15: #{forward.4} parent=5 // pred_region
      // Predicated region
      $region17: #{forward.4} parent=15 // pred_check
        %p153 = pneg %p72
      $region18: #{forward.4} parent=15 // pred_check_branch
        %155 = sbr.rel (%p153) target = $region20
      $region19: #{forward.4} parent=15 // pred_region
        %s156 = sshra.s32 %s24, 7
        %s157 = sand.u32 %s24, 127
        %s158 = sadd.s32 %s156, %s23
        %s159 = smul.u32 %s158, 128
        %s160 = sshra.s32 %s24, 7
        %s161 = sand.u32 %s24, 127
        %s162 = sadd.s32 %s159, %s161
        %s163 = sld [smem:[#allocation4 + %s162]]
        %p164 = scmp.lt.s32.totalorder %s22, 0
        %s165 = scalar_select %p164, %s22, 0
        %p166 = scmp.lt.s32.totalorder %s163, 0
        %s167 = scalar_select %p166, %s163, 0
        %s168 = sadd.s32 %s167, %s165
        %s169 = smul.addr %s168, 4
        %s170 = scalar_lea.vmem %s1, %s169
        %s171 = sshra.s32 %s24, 7
        %s172 = sand.u32 %s24, 127
        %s173 = sadd.s32 %s171, %s23
        %s174 = smul.u32 %s173, 128
        %s175 = sshra.s32 %s24, 7
        %s176 = sand.u32 %s24, 127
        %s177 = sadd.s32 %s174, %s176
        %s178 = sld [smem:[#allocation4 + %s177]]
      $region20: #{forward.4} parent=15 // pred_fallthru
        _
      // Predicated region
      $region21: #{forward.4} parent=15 // pred_check
        %p179 = pneg %p100
      $region22: #{forward.4} parent=15 // pred_check_branch
        %181 = sbr.rel (%p179) target = $region24
      $region23: #{forward.4} parent=15 // pred_region
        %s182 = smul.u32 16, %s24
        %p183 = scmp.lt.s32.totalorder %s23, 1
        %s184 = scalar_select %p183, %s23, 1
        %p185 = scmp.lt.s32.totalorder %s182, 15
        %s186 = scalar_select %p185, %s182, 15
        %s187 = smul.addr %s184, 16
        %s188 = sadd.s32 %s186, %s187
        %s189 = smul.addr %s188, 4
        %s190 = scalar_lea.vmem %s2, %s189
        %s191 = smul.u32 16, %s24
      $region24: #{forward.4} parent=15 // pred_fallthru
        _
    $region16: #{forward.4} parent=5 // pred_fallthru
      _
    %p192 = scmp.le.s32.totalorder 1, %s15
    %p193 = scmp.lt.s32.totalorder %s15, 3
    %p194 = pnand %p192, %p193
    %p195 = pneg %p194
    // Predicated region
    $region25: #{forward.4} parent=5 // pred_check
      _
    $region26: #{forward.4} parent=5 // pred_check_branch
      %197 = sbr.rel (%p194) target = $region28
    $region27: #{forward.4} parent=5 // pred_region
      %s198 = ssub.s32 %s15, 1
      %s199 = sshra.s32 %s27, 7
      %s200 = sand.u32 %s27, 127
      %s201 = sadd.s32 %s199, %s26
      %s202 = smul.u32 %s201, 128
      %s203 = sshra.s32 %s27, 7
      %s204 = sand.u32 %s27, 127
      %s205 = sadd.s32 %s202, %s204
      %s206 = sld [smem:[#allocation4 + %s205]]
      %p207 = scmp.lt.s32.totalorder %s25, 0
      %s208 = scalar_select %p207, %s25, 0
      %p209 = scmp.lt.s32.totalorder %s206, 0
      %s210 = scalar_select %p209, %s206, 0
      %s211 = sadd.s32 %s210, %s208
      %s212 = smul.addr %s211, 4
      %s213 = scalar_lea.vmem %s1, %s212
      %p214 = pneg %p78
      %p215 = pneg %p75
      %s216 = smul.u32 16, %s27
      %p217 = scmp.lt.s32.totalorder %s26, 1
      %s218 = scalar_select %p217, %s26, 1
      %p219 = scmp.lt.s32.totalorder %s216, 15
      %s220 = scalar_select %p219, %s216, 15
      %s221 = smul.addr %s218, 16
      %s222 = sadd.s32 %s220, %s221
      %s223 = smul.addr %s222, 4
      %s224 = scalar_lea.vmem %s2, %s223
      %p225 = pneg %p106
      %p226 = pneg %p103
      %p227 = pneg %p134
      %p228 = pneg %p131
      %p229 = scmp.lt.s32.totalorder %s25, 0
      %s230 = scalar_select %p229, %s25, 0
      %p231 = scmp.lt.s32.totalorder %s26, 1
      %s232 = scalar_select %p231, %s26, 1
      %s233 = smul.addr %s230, 2
      %s234 = sadd.s32 %s232, %s233
      %s235 = smul.addr %s234, 8
      %s236 = scalar_lea.vmem %s3, %s235
      %s237 = sshra.s32 %s27, 7
      %s238 = sand.u32 %s27, 127
      %s239 = sadd.s32 %s237, %s26
      %s240 = smul.u32 %s239, 128
      %s241 = sshra.s32 %s27, 7
      %s242 = sand.u32 %s27, 127
      %s243 = sadd.s32 %s240, %s242
      %s244 = sld [smem:[#allocation4 + %s243]]
      %p245 = scmp.lt.s32.totalorder %s25, 0
      %s246 = scalar_select %p245, %s25, 0
      %p247 = scmp.lt.s32.totalorder %s244, 0
      %s248 = scalar_select %p247, %s244, 0
      %s249 = sadd.s32 %s248, %s246
      %s250 = smul.addr %s249, 4
      %s251 = scalar_lea.vmem %s1, %s250
      %s252 = sshra.s32 %s27, 7
      %s253 = sand.u32 %s27, 127
      %s254 = sadd.s32 %s252, %s26
      %s255 = smul.u32 %s254, 128
      %s256 = sshra.s32 %s27, 7
      %s257 = sand.u32 %s27, 127
      %s258 = sadd.s32 %s255, %s257
      %s259 = sld [smem:[#allocation4 + %s258]]
      %s260 = smul.u32 16, %s27
      %p261 = scmp.lt.s32.totalorder %s26, 1
      %s262 = scalar_select %p261, %s26, 1
      %p263 = scmp.lt.s32.totalorder %s260, 15
      %s264 = scalar_select %p263, %s260, 15
      %s265 = smul.addr %s262, 16
      %s266 = sadd.s32 %s264, %s265
      %s267 = smul.addr %s266, 4
      %s268 = scalar_lea.vmem %s2, %s267
      %s269 = smul.u32 16, %s27
      %p270 = scmp.lt.s32.totalorder %s25, 0
      %s271 = scalar_select %p270, %s25, 0
      %p272 = scmp.lt.s32.totalorder %s26, 1
      %s273 = scalar_select %p272, %s26, 1
      %s274 = smul.addr %s271, 2
      %s275 = sadd.s32 %s273, %s274
      %s276 = smul.addr %s275, 8
      %s277 = scalar_lea.vmem %s3, %s276
      %p279 = scmp.eq.s32.totalorder %s27, 0
      // Predicated region
      $region29: #{forward.4} parent=27 // pred_check
        %p280 = pneg %p279
      $region30: #{forward.4} parent=27 // pred_check_branch
        %282 = sbr.rel (%p280) target = $region32
      $region31: #{forward.4} parent=27 // pred_region
        %283 = vst [vmem:[#allocation2] sm:$0xff] 0.0
      $region32: #{forward.4} parent=27 // pred_fallthru
        _
      %v284 = vld [vmem:[#allocation2] sm:$0xff]
      %v285 = vld [vmem:[%s251] sm:$0xf]
      %v286 = vld [vmem:[%s268] sm:$0xf]
      %v287 = vld [vmem:[%s268 + $0x4] sm:$0xf]
      %v288 = vld [vmem:[%s268 + $0x8] sm:$0xf]
      %v289 = vld [vmem:[%s268 + $0xc] sm:$0xf]
      %v290 = vld [vmem:[%s268 + $0x10] sm:$0xf]
      %v291 = vld [vmem:[%s268 + $0x14] sm:$0xf]
      %v292 = vld [vmem:[%s268 + $0x18] sm:$0xf]
      %v293 = vld [vmem:[%s268 + $0x1c] sm:$0xf]
      %v294 = vld [vmem:[%s268 + $0x20] sm:$0xf]
      %v295 = vld [vmem:[%s268 + $0x24] sm:$0xf]
      %v296 = vld [vmem:[%s268 + $0x28] sm:$0xf]
      %v297 = vld [vmem:[%s268 + $0x2c] sm:$0xf]
      %v298 = vld [vmem:[%s268 + $0x30] sm:$0xf]
      %v299 = vld [vmem:[%s268 + $0x34] sm:$0xf]
      %v300 = vld [vmem:[%s268 + $0x38] sm:$0xf]
      %v301 = vld [vmem:[%s268 + $0x3c] sm:$0xf]
      %v318 = vunpack.c.l.b16 %v286
      %v319 = vunpack.c.l.b16 %v287
      %v320 = vunpack.c.l.b16 %v288
      %v321 = vunpack.c.l.b16 %v289
      %v322 = vunpack.c.l.b16 %v290
      %v323 = vunpack.c.l.b16 %v291
      %v324 = vunpack.c.l.b16 %v292
      %v325 = vunpack.c.l.b16 %v293
      %v326 = vunpack.c.l.b16 %v294
      %v327 = vunpack.c.l.b16 %v295
      %v328 = vunpack.c.l.b16 %v296
      %v329 = vunpack.c.l.b16 %v297
      %v330 = vunpack.c.l.b16 %v298
      %v331 = vunpack.c.l.b16 %v299
      %v332 = vunpack.c.l.b16 %v300
      %v333 = vunpack.c.l.b16 %v301
      %v334 = vpack.c.b16 %v319, %v318
      %v335 = vpack.c.b16 %v321, %v320
      %v336 = vpack.c.b16 %v323, %v322
      %v337 = vpack.c.b16 %v325, %v324
      %v338 = vpack.c.b16 %v327, %v326
      %v339 = vpack.c.b16 %v329, %v328
      %v340 = vpack.c.b16 %v331, %v330
      %v341 = vpack.c.b16 %v333, %v332
      %350 = vmatprep.subr.bf16.mxu0 0
      %351 = vmatpush1.bf16.msra.mxu0 %v341
      %352 = vmatprep.subr.bf16.mxu0 0
      %353 = vmatpush1.bf16.msra.mxu0 %v340
      %354 = vmatprep.subr.bf16.mxu0 0
      %355 = vmatpush1.bf16.msra.mxu0 %v339
      %356 = vmatprep.subr.bf16.mxu0 0
      %357 = vmatpush1.bf16.msra.mxu0 %v338
      %358 = vmatprep.subr.bf16.mxu0 0
      %359 = vmatpush1.bf16.msra.mxu0 %v337
      %360 = vmatprep.subr.bf16.mxu0 0
      %361 = vmatpush1.bf16.msra.mxu0 %v336
      %362 = vmatprep.subr.bf16.mxu0 0
      %363 = vmatpush1.bf16.msra.mxu0 %v335
      %364 = vmatprep.subr.bf16.mxu0 0
      %365 = vmatpush1.bf16.msra.mxu0 %v334
      %366 = vmatprep.subr.bf16.mxu0 0
      %367 = vmatpush2.bf16.msra.mxu0 0
      %368 = vmatprep.subr.bf16.mxu0 0
      %369 = vmatpush2.bf16.msra.mxu0 0
      %370 = vmatprep.subr.bf16.mxu0 0
      %371 = vmatpush2.bf16.msra.mxu0 0
      %372 = vmatprep.subr.bf16.mxu0 0
      %373 = vmatpush2.bf16.msra.mxu0 0
      %374 = vmatprep.subr.bf16.mxu0 0
      %375 = vmatpush2.bf16.msra.mxu0 0
      %376 = vmatprep.subr.bf16.mxu0 0
      %377 = vmatpush2.bf16.msra.mxu0 0
      %378 = vmatprep.subr.bf16.mxu0 0
      %379 = vmatpush2.bf16.msra.mxu0 0
      %380 = vmatprep.subr.bf16.mxu0 0
      %381 = vmatpush2.bf16.msra.mxu0 0
      %382 = vmatprep.mubr.bf16.mxu0 0
      %383 = vmatmul.mubr.bf16.gmra.mxu0 %v285
      %v384 = vpop.f32.mrf.mxu0
      %v385 = vadd.f32 0.0, %v384
      %v386 = vpop.f32.mrf.mxu0
      %v387 = vpop.f32.mrf.mxu0
      %v388 = vpop.f32.mrf.mxu0
      %389 = vdwg.mxu0
      %v390 = vadd.f32 %v284, %v385
      %391 = vst [vmem:[#allocation2] sm:$0xff] %v390
      // Predicated region
      $region33: #{forward.4} parent=27 // pred_check
        %p392 = pneg %p279
      $region34: #{forward.4} parent=27 // pred_check_branch
        %394 = sbr.rel (%p392) target = $region36
      $region35: #{forward.4} parent=27 // pred_region
        %v395 = vld [vmem:[#allocation2] sm:$0xff]
        %396 = vst [vmem:[%s277] sm:$0xff] %v395
      $region36: #{forward.4} parent=27 // pred_fallthru
        _
      %p397 = scmp.lt.s32.totalorder %s25, 0
      %s398 = scalar_select %p397, %s25, 0
      %p399 = scmp.lt.s32.totalorder %s26, 1
      %s400 = scalar_select %p399, %s26, 1
      %s401 = smul.addr %s398, 2
      %s402 = sadd.s32 %s400, %s401
      %s403 = smul.addr %s402, 8
      %s404 = scalar_lea.vmem %s3, %s403
      // Predicated region
      $region37: #{forward.4} parent=27 // pred_check
        %p405 = pneg %p131
      $region38: #{forward.4} parent=27 // pred_check_branch
        %407 = sbr.rel (%p405) target = $region40
      $region39: #{forward.4} parent=27 // pred_region
        _
      $region40: #{forward.4} parent=27 // pred_fallthru
        _
    $region28: #{forward.4} parent=5 // pred_fallthru
      _
    %p408 = scmp.le.s32.totalorder 2, %s15
    // Predicated region
    $region41: #{forward.4} parent=5 // pred_check
      %p409 = pneg %p408
    $region42: #{forward.4} parent=5 // pred_check_branch
      %411 = sbr.rel (%p409) target = $region44
    $region43: #{forward.4} parent=5 // pred_region
      %s412 = ssub.s32 %s15, 2
      // Predicated region
      $region45: #{forward.4} parent=43 // pred_check
        %p413 = pneg %p137
      $region46: #{forward.4} parent=43 // pred_check_branch
        %415 = sbr.rel (%p413) target = $region48
      $region47: #{forward.4} parent=43 // pred_region
        %p416 = scmp.lt.s32.totalorder %s28, 0
        %s417 = scalar_select %p416, %s28, 0
        %p418 = scmp.lt.s32.totalorder %s29, 1
        %s419 = scalar_select %p418, %s29, 1
        %s420 = smul.addr %s417, 2
        %s421 = sadd.s32 %s419, %s420
        %s422 = smul.addr %s421, 8
        %s423 = scalar_lea.vmem %s3, %s422
      $region48: #{forward.4} parent=43 // pred_fallthru
        _
    $region44: #{forward.4} parent=5 // pred_fallthru
      _
  $region6: #{forward.4} parent=0 // loop_footer
    %s19 = sadd.s32 1, %s15
  $region7: #{forward.4} parent=0 // loop_footer_branch
    %14 = sbr.rel target = $region3
  $region8: #{forward.4} parent=0 // loop_exit
    _

// kernel: forward.5
$region0: #{forward.5}
  #allocation0 [shape = 'u32[]', space=smem, size = 0x4, offset = 0x4, fixed_abs, tag = 'smem constant byte address 0x4 - core index']
  #allocation1 [shape = 'u32[144,128]{1,0:T(1,128)}', space=vmem, size = 0x12000, scoped, tag = 'internal scratch']
  %s0 = inlined_call_operand.vmem [shape: f32[16,8], index: 0, kind: input, shape index: {}]
  %s1 = inlined_call_operand.vmem [shape: f32[8,128], index: 1, kind: input, shape index: {}]
  %s2 = inlined_call_operand.vmem [shape: f32[16,128], index: 2, kind: output, shape index: {}]
  %s3 = sld [smem:[#allocation0]]
  $region18: #{forward.5} parent=0
    _
  %s5 = ssub.s32 1, %s3
  %s6 = scalar_select 0, %s5, %s3
  // Predicated region
  $region2: #{forward.5} parent=0 // pred_check
    _
  $region3: #{forward.5} parent=0 // pred_check_branch
    %8 = sbr.rel (0) target = $region5
  $region4: #{forward.5} parent=0 // pred_region
    _
  $region5: #{forward.5} parent=0 // pred_fallthru
    _
  // Predicated region
  $region6: #{forward.5} parent=0 // pred_check
    _
  $region7: #{forward.5} parent=0 // pred_check_branch
    %10 = sbr.rel (0) target = $region9
  $region8: #{forward.5} parent=0 // pred_region
    _
  $region9: #{forward.5} parent=0 // pred_fallthru
    _
  %v11 = vld [vmem:[%s0] sm:$0xff]
  %v12 = vld [vmem:[%s0 + $0x8] sm:$0xff]
  %v13 = vld [vmem:[%s1] sm:$0xff]
  %vm14 = vcmask 64512
  %v16 = vsel %vm14, %v11, 0
  %v19 = vsel %vm14, %v12, 0
  %21 = vmatprep.subr.mxu0 0.0
  %22 = vmatpush1.msra.mxu0 0.0
  %23 = vmatprep.subr.mxu0 0.0
  %24 = vmatpush1.msra.mxu0 0.0
  %25 = vmatprep.subr.mxu0 0.0
  %26 = vmatpush1.msra.mxu0 0.0
  %27 = vmatprep.subr.mxu0 0.0
  %28 = vmatpush1.msra.mxu0 0.0
  %29 = vmatprep.subr.mxu0 0.0
  %30 = vmatpush1.msra.mxu0 0.0
  %31 = vmatprep.subr.mxu0 0.0
  %32 = vmatpush1.msra.mxu0 0.0
  %33 = vmatprep.subr.mxu0 0.0
  %34 = vmatpush1.msra.mxu0 0.0
  %35 = vmatprep.subr.mxu0 0.0
  %36 = vmatpush1.msra.mxu0 0.0
  %37 = vmatprep.subr.mxu0 0.0
  %38 = vmatpush1.msra.mxu0 0.0
  %39 = vmatprep.subr.mxu0 0.0
  %40 = vmatpush1.msra.mxu0 0.0
  %41 = vmatprep.subr.mxu0 0.0
  %42 = vmatpush1.msra.mxu0 0.0
  %43 = vmatprep.subr.mxu0 0.0
  %44 = vmatpush1.msra.mxu0 0.0
  %45 = vmatprep.subr.mxu0 0.0
  %46 = vmatpush1.msra.mxu0 0.0
  %47 = vmatprep.subr.mxu0 0.0
  %48 = vmatpush1.msra.mxu0 0.0
  %49 = vmatprep.subr.mxu0 0.0
  %50 = vmatpush1.msra.mxu0 0.0
  %51 = vmatprep.subr.mxu0 0.0
  %52 = vmatpush1.msra.mxu0 %v13
  %53 = vmatprep.subr.mxu0 0.0
  %54 = vmatpush2.msra.mxu0 0.0
  %55 = vmatprep.subr.mxu0 0.0
  %56 = vmatpush2.msra.mxu0 0.0
  %57 = vmatprep.subr.mxu0 0.0
  %58 = vmatpush2.msra.mxu0 0.0
  %59 = vmatprep.subr.mxu0 0.0
  %60 = vmatpush2.msra.mxu0 0.0
  %61 = vmatprep.subr.mxu0 0.0
  %62 = vmatpush2.msra.mxu0 0.0
  %63 = vmatprep.subr.mxu0 0.0
  %64 = vmatpush2.msra.mxu0 0.0
  %65 = vmatprep.subr.mxu0 0.0
  %66 = vmatpush2.msra.mxu0 0.0
  %67 = vmatprep.subr.mxu0 0.0
  %68 = vmatpush2.msra.mxu0 0.0
  %69 = vmatprep.subr.mxu0 0.0
  %70 = vmatpush2.msra.mxu0 0.0
  %71 = vmatprep.subr.mxu0 0.0
  %72 = vmatpush2.msra.mxu0 0.0
  %73 = vmatprep.subr.mxu0 0.0
  %74 = vmatpush2.msra.mxu0 0.0
  %75 = vmatprep.subr.mxu0 0.0
  %76 = vmatpush2.msra.mxu0 0.0
  %77 = vmatprep.subr.mxu0 0.0
  %78 = vmatpush2.msra.mxu0 0.0
  %79 = vmatprep.subr.mxu0 0.0
  %80 = vmatpush2.msra.mxu0 0.0
  %81 = vmatprep.subr.mxu0 0.0
  %82 = vmatpush2.msra.mxu0 0.0
  %83 = vmatprep.subr.mxu0 0.0
  %84 = vmatpush2.msra.mxu0 0.0
  %85 = vmatprep.mubr.f32.mxu0 0.0
  %86 = vmatmul.mubr.f32.gmra.mxu0 %v16
  %v87 = vpop.f32.mrf.mxu0
  %v88 = vadd.f32 0.0, %v87
  %v89 = vpop.f32.mrf.mxu0
  %90 = vmatprep.mubr.f32.mxu0 0.0
  %91 = vmatmul.mubr.f32.gmra.mxu0 %v19
  %v92 = vpop.f32.mrf.mxu0
  %v93 = vadd.f32 0.0, %v92
  %v94 = vpop.f32.mrf.mxu0
  %95 = vdwg.mxu0
  %96 = vst [vmem:[%s2] sm:$0xff] %v88
  %97 = vst [vmem:[%s2 + $0x8] sm:$0xff] %v93
  // Predicated region
  $region10: #{forward.5} parent=0 // pred_check
    _
  $region11: #{forward.5} parent=0 // pred_check_branch
    %99 = sbr.rel (0) target = $region13
  $region12: #{forward.5} parent=0 // pred_region
    _
  $region13: #{forward.5} parent=0 // pred_fallthru
    _
  // Predicated region
  $region14: #{forward.5} parent=0 // pred_check
    _
  $region15: #{forward.5} parent=0 // pred_check_branch
    %101 = sbr.rel (0) target = $region17
  $region16: #{forward.5} parent=0 // pred_region
    _
  $region17: #{forward.5} parent=0 // pred_fallthru
    _

</llo_original>
